<compile_context>
chip_gen: v5e
topology: v5e:2x2
jax: 0.10.0
libtpu: 0.0.40
codegen_flags: <defaults>
</compile_context>

<pallas_src>
import functools

import jax
import jax.numpy as jnp
from jax.experimental import pallas as pl
from jax.experimental.pallas import tpu as pltpu

D_IN, D_OUT = 100, 200  # nn.Linear(100, 200)


def _round_up(n: int, m: int) -> int:
    return ((n + m - 1) // m) * m


def _pick_tb(batch: int, tb) -> int:
    """Batch-tile rows: a multiple of 8 (sublanes) or the full batch (always legal)."""
    if tb is not None:
        cand = tb
    elif batch <= 256:
        cand = batch                       # single tile
    elif batch <= 2048:
        cand = pl.cdiv(batch, 2)           # 2 balanced tiles (v7x megacore)
    else:
        n_tiles = max(2, pl.cdiv(batch, 1024))
        if n_tiles % 2:
            n_tiles += 1                   # even tile count -> balanced across 2 TCs
        cand = pl.cdiv(batch, n_tiles)
    cand = _round_up(cand, 8)
    return batch if cand >= batch else cand


def _linear_relu_kernel(x_ref, w_ref, b_ref, o_ref):
    # MXU matmul with f32 accumulate; bias add + ReLU on the VPU.
    y = jnp.dot(x_ref[...], w_ref[...], preferred_element_type=jnp.float32)
    y = y + b_ref[...]                      # b_ref is [1, 200]; broadcasts over rows
    o_ref[...] = jnp.maximum(y, 0.0).astype(o_ref.dtype)


@functools.partial(jax.jit, static_argnames=("tb",))
def part1_forward_pallas(x, w, b, *, tb=None):
    """x: [B, 100] f32, w: [100, 200] f32 (in, out layout), b: [200] f32 -> [B, 200] f32."""
    B = x.shape[0]
    TB = _pick_tb(B, tb)
    num_tiles = pl.cdiv(B, TB)

    b2 = b.reshape(1, D_OUT)

    # x input spec: one batch tile per grid step; triple-buffer when multi-tile.
    if num_tiles >= 2:
        x_spec = pl.BlockSpec((TB, D_IN), lambda i: (i, 0),
                              pipeline_mode=pl.Buffered(3))
    else:
        x_spec = pl.BlockSpec((TB, D_IN), lambda i: (i, 0))

    cost = pl.CostEstimate(
        flops=2 * B * D_IN * D_OUT,
        transcendentals=0,
        bytes_accessed=4 * (B * D_IN          # x in
                            + D_IN * D_OUT    # w in (resident, counted once)
                            + D_OUT           # b in
                            + B * D_OUT),     # out
    )

    return pl.pallas_call(
        _linear_relu_kernel,
        out_shape=jax.ShapeDtypeStruct((B, D_OUT), x.dtype),
        grid=(num_tiles,),
        in_specs=[
            x_spec,
            # w, b: constant block index -> stay resident in VMEM across steps.
            pl.BlockSpec((D_IN, D_OUT), lambda i: (0, 0)),
            pl.BlockSpec((1, D_OUT), lambda i: (0, 0)),
        ],
        out_specs=pl.BlockSpec((TB, D_OUT), lambda i: (i, 0)),
        compiler_params=pltpu.CompilerParams(
            dimension_semantics=("parallel",),   # independent batch tiles (megacore)
        ),
        cost_estimate=cost,
    )(x, w, b2)


@jax.jit
def _part1_xla(x, w, b):
    return jnp.maximum(x @ w + b[None, :], 0.0)


def part1_forward(x, w, b, *, tb=None, small_batch_xla=True):
    """relu(x @ w + b).  Tiny batches skip Pallas (fixed launch cost dominates)."""
    if small_batch_xla and x.shape[0] <= 128:
        return _part1_xla(x, w, b)
    return part1_forward_pallas(x, w, b, tb=tb)


if __name__ == "__main__":
    key = jax.random.PRNGKey(0)
    kx, kw, kb, kx2 = jax.random.split(key, 4)

    # Deterministic init mimicking nn.Linear default (uniform in +/- 1/sqrt(fan_in)).
    bound = 1.0 / jnp.sqrt(jnp.float32(D_IN))
    w = jax.random.uniform(kw, (D_IN, D_OUT), dtype=jnp.float32, minval=-bound, maxval=bound)
    b = jax.random.uniform(kb, (D_OUT,), dtype=jnp.float32, minval=-bound, maxval=bound)

    # Small batch straight through the Pallas kernel (single full-dim tile).
    B1 = 8
    x1 = jax.random.normal(kx, (B1, D_IN), dtype=jnp.float32)
    out1 = part1_forward_pallas(x1, w, b)
    jax.block_until_ready(out1)
    ref1 = jnp.maximum(x1 @ w + b, 0.0)
    assert out1.shape == (B1, D_OUT)
    assert jnp.allclose(out1, ref1, atol=1e-5, rtol=1e-5)

    # Larger batch through the wrapper (2 balanced "parallel" tiles, buffered x).
    B2 = 1024
    x2 = jax.random.normal(kx2, (B2, D_IN), dtype=jnp.float32)
    out2 = part1_forward(x2, w, b)
    jax.block_until_ready(out2)
    ref2 = jnp.maximum(x2 @ w + b, 0.0)
    assert out2.shape == (B2, D_OUT)
    assert jnp.allclose(out2, ref2, atol=1e-5, rtol=1e-5)

    # Ragged batch (not a multiple of the tile) exercises masked last-tile writes.
    B3 = 777
    x3 = jax.random.normal(jax.random.PRNGKey(3), (B3, D_IN), dtype=jnp.float32)
    out3 = part1_forward(x3, w, b, small_batch_xla=False)
    jax.block_until_ready(out3)
    ref3 = jnp.maximum(x3 @ w + b, 0.0)
    assert out3.shape == (B3, D_OUT)
    assert jnp.allclose(out3, ref3, atol=1e-5, rtol=1e-5)

    print("KERNEL_OK")
</pallas_src>

<mosaic_0001>
module attributes {stable_mosaic.version = 11 : i64} {
  func.func @_linear_relu_kernel(%arg0: i32, %arg1: memref<8x100xf32, #tpu.memory_space<vmem>>, %arg2: memref<100x200xf32, #tpu.memory_space<vmem>>, %arg3: memref<1x200xf32, #tpu.memory_space<vmem>>, %arg4: memref<8x200xf32, #tpu.memory_space<vmem>>) attributes {dimension_semantics = [#tpu.dimension_semantics<parallel>], iteration_bounds = array<i64: 1>, scalar_prefetch = 0 : i64, scratch_operands = 0 : i64, tpu.core_type = #tpu.core_type<tc>, window_params = [{transform_indices = @transform_0, window_bounds = array<i64: 8, 100>}, {pipeline_mode = #tpu.pipeline_mode<synchronous>, transform_indices = @transform_1, window_bounds = array<i64: 100, 200>}, {pipeline_mode = #tpu.pipeline_mode<synchronous>, transform_indices = @transform_2, window_bounds = array<i64: 1, 200>}, {transform_indices = @transform_3, window_bounds = array<i64: 8, 200>}]} {
    %c0 = arith.constant 0 : index
    %c0_0 = arith.constant 0 : index
    %0 = vector.load %arg1[%c0, %c0_0] : memref<8x100xf32, #tpu.memory_space<vmem>>, vector<8x100xf32>
    %c0_1 = arith.constant 0 : index
    %c0_2 = arith.constant 0 : index
    %1 = vector.load %arg2[%c0_1, %c0_2] : memref<100x200xf32, #tpu.memory_space<vmem>>, vector<100x200xf32>
    %cst = arith.constant dense<0.000000e+00> : vector<8x200xf32>
    %2 = tpu.matmul %0, %1, %cst {dimension_numbers = #tpu.dot_dimension_numbers<[1], [0], [0], [1], [0, 0, 1, 1], [], []>} : vector<8x100xf32>, vector<100x200xf32>, vector<8x200xf32> -> vector<8x200xf32>
    %c0_3 = arith.constant 0 : index
    %c0_4 = arith.constant 0 : index
    %3 = vector.load %arg3[%c0_3, %c0_4] : memref<1x200xf32, #tpu.memory_space<vmem>>, vector<1x200xf32>
    %4 = vector.broadcast %3 : vector<1x200xf32> to vector<8x200xf32>
    %5 = arith.addf %2, %4 : vector<8x200xf32>
    %cst_5 = arith.constant 0.000000e+00 : f32
    %6 = vector.broadcast %cst_5 : f32 to vector<8x200xf32>
    %7 = arith.maximumf %5, %6 : vector<8x200xf32>
    %c0_6 = arith.constant 0 : index
    %c0_7 = arith.constant 0 : index
    %8 = vector.load %arg4[%c0_6, %c0_7] : memref<8x200xf32, #tpu.memory_space<vmem>>, vector<8x200xf32>
    tpu.vector_store %arg4[%c0_6, %c0_7], %7 {strides = array<i32>} : memref<8x200xf32, #tpu.memory_space<vmem>>, vector<8x200xf32>,
    return
  }
  func.func @transform_0(%arg0: i32) -> (i32, i32) {
    %c0_i32 = arith.constant 0 : i32
    %c0_i32_0 = arith.constant 0 : i32
    return %arg0, %c0_i32 : i32, i32
  }
  func.func @transform_1(%arg0: i32) -> (i32, i32) {
    %c0_i32 = arith.constant 0 : i32
    %c0_i32_0 = arith.constant 0 : i32
    %c0_i32_1 = arith.constant 0 : i32
    return %c0_i32, %c0_i32_0 : i32, i32
  }
  func.func @transform_2(%arg0: i32) -> (i32, i32) {
    %c0_i32 = arith.constant 0 : i32
    %c0_i32_0 = arith.constant 0 : i32
    %c0_i32_1 = arith.constant 0 : i32
    return %c0_i32, %c0_i32_0 : i32, i32
  }
  func.func @transform_3(%arg0: i32) -> (i32, i32) {
    %c0_i32 = arith.constant 0 : i32
    %c0_i32_0 = arith.constant 0 : i32
    return %arg0, %c0_i32 : i32, i32
  }
}

</mosaic_0001>

<llo_original>
// kernel: part1_forward_pallas.1
$region0: #{part1_forward_pallas.1}
  #allocation0 [shape = 'u32[]', space=smem, size = 0x4, offset = 0x4, fixed_abs, tag = 'smem constant byte address 0x4 - core index']
  #allocation1 [shape = 'u32[72,128]{1,0:T(1,128)}', space=vmem, size = 0x9000, scoped, tag = 'internal scratch']
  %s0 = inlined_call_operand.vmem [shape: f32[8,100], index: 0, kind: input, shape index: {}]
  %s1 = inlined_call_operand.vmem [shape: f32[100,200], index: 1, kind: input, shape index: {}]
  %s2 = inlined_call_operand.vmem [shape: f32[1,200], index: 2, kind: input, shape index: {}]
  %s3 = inlined_call_operand.hbm [shape: f32[8,200], index: 3, kind: output, shape index: {}]
  %s4 = sld [smem:[#allocation0]]
  $region22: #{part1_forward_pallas.1} parent=0
    _
  %s6 = ssub.s32 1, %s4
  %s7 = scalar_select 0, %s6, %s4
  $region1: #{part1_forward_pallas.1} parent=0
    #allocation2 [shape = 'u8[8192]{0}', space=vmem, size = 0x2000, scoped, tag = 'output window, operand 0, single buffered']
    #allocation3 [shape = 's32[1]{0}', space=sflag, size = 0x4, scoped, tag = 'scoped memory for part1_forward_pallas.1']
    %8 = vsyncpa [#allocation3], 0
    // Predicated region
    $region2: #{part1_forward_pallas.1} parent=1 // pred_check
      _
    $region3: #{part1_forward_pallas.1} parent=1 // pred_check_branch
      %10 = sbr.rel (0) target = $region5
    $region4: #{part1_forward_pallas.1} parent=1 // pred_region
      _
    $region5: #{part1_forward_pallas.1} parent=1 // pred_fallthru
      _
    // Predicated region
    $region6: #{part1_forward_pallas.1} parent=1 // pred_check
      _
    $region7: #{part1_forward_pallas.1} parent=1 // pred_check_branch
      %12 = sbr.rel (0) target = $region9
    $region8: #{part1_forward_pallas.1} parent=1 // pred_region
      _
    $region9: #{part1_forward_pallas.1} parent=1 // pred_fallthru
      _
    // Predicated region
    $region10: #{part1_forward_pallas.1} parent=1 // pred_check
      _
    $region11: #{part1_forward_pallas.1} parent=1 // pred_check_branch
      %14 = sbr.rel (0) target = $region13
    $region12: #{part1_forward_pallas.1} parent=1 // pred_region
      _
    $region13: #{part1_forward_pallas.1} parent=1 // pred_fallthru
      _
    %v15 = vld [vmem:[%s0] sm:$0xff]
    %v16 = vld [vmem:[%s1] sm:$0xff]
    %v17 = vld [vmem:[%s1 + $0x8] sm:$0xff]
    %v18 = vld [vmem:[%s1 + $0x10] sm:$0xff]
    %v19 = vld [vmem:[%s1 + $0x18] sm:$0xff]
    %v20 = vld [vmem:[%s1 + $0x20] sm:$0xff]
    %v21 = vld [vmem:[%s1 + $0x28] sm:$0xff]
    %v22 = vld [vmem:[%s1 + $0x30] sm:$0xff]
    %v23 = vld [vmem:[%s1 + $0x38] sm:$0xff]
    %v24 = vld [vmem:[%s1 + $0x40] sm:$0xff]
    %v25 = vld [vmem:[%s1 + $0x48] sm:$0xff]
    %v26 = vld [vmem:[%s1 + $0x50] sm:$0xff]
    %v27 = vld [vmem:[%s1 + $0x58] sm:$0xff]
    %v28 = vld [vmem:[%s1 + $0x60] sm:$0xff]
    %v29 = vld [vmem:[%s1 + $0x68] sm:$0xff]
    %v30 = vld [vmem:[%s1 + $0x70] sm:$0xff]
    %v31 = vld [vmem:[%s1 + $0x78] sm:$0xff]
    %v32 = vld [vmem:[%s1 + $0x80] sm:$0xff]
    %v33 = vld [vmem:[%s1 + $0x88] sm:$0xff]
    %v34 = vld [vmem:[%s1 + $0x90] sm:$0xff]
    %v35 = vld [vmem:[%s1 + $0x98] sm:$0xff]
    %v36 = vld [vmem:[%s1 + $0xa0] sm:$0xff]
    %v37 = vld [vmem:[%s1 + $0xa8] sm:$0xff]
    %v38 = vld [vmem:[%s1 + $0xb0] sm:$0xff]
    %v39 = vld [vmem:[%s1 + $0xb8] sm:$0xff]
    %v40 = vld [vmem:[%s1 + $0xc0] sm:$0xf]
    %v41 = vld [vmem:[%s1 + $0xc8] sm:$0xf]
    %v42 = vld [vmem:[%s2] sm:$0x3]
    %v44 = vperm.slane %v42, 0
    %v45 = vperm.slane %v42, 1
    %vm48 = vcmask 818176
    %v50 = vsel %vm48, %v15, 0
    %vm52 = vcmask 1043456
    %v54 = vsel %vm52, %v40, 0
    %v57 = vsel %vm52, %v41, 0
    %59 = vmatpush.msra.mxu0 0.0
    %60 = vmatpush.msra.mxu0 0.0
    %61 = vmatpush.msra.mxu0 0.0
    %62 = vmatpush.msra.mxu0 %v54
    %63 = vmatpush.msra.mxu0 %v38
    %64 = vmatpush.msra.mxu0 %v36
    %65 = vmatpush.msra.mxu0 %v34
    %66 = vmatpush.msra.mxu0 %v32
    %67 = vmatpush.msra.mxu0 %v30
    %68 = vmatpush.msra.mxu0 %v28
    %69 = vmatpush.msra.mxu0 %v26
    %70 = vmatpush.msra.mxu0 %v24
    %71 = vmatpush.msra.mxu0 %v22
    %72 = vmatpush.msra.mxu0 %v20
    %73 = vmatpush.msra.mxu0 %v18
    %74 = vmatpush.msra.mxu0 %v16
    %75 = vmatmul.f32.gmra.mxu0 %v50
    %v76 = vpop.f32.mrf.mxu0
    %v77 = vadd.f32 %v44, %v76
    %78 = vdwg.mxu0
    %79 = vmatpush.msra.mxu0 0.0
    %80 = vmatpush.msra.mxu0 0.0
    %81 = vmatpush.msra.mxu0 0.0
    %82 = vmatpush.msra.mxu0 %v57
    %83 = vmatpush.msra.mxu0 %v39
    %84 = vmatpush.msra.mxu0 %v37
    %85 = vmatpush.msra.mxu0 %v35
    %86 = vmatpush.msra.mxu0 %v33
    %87 = vmatpush.msra.mxu0 %v31
    %88 = vmatpush.msra.mxu0 %v29
    %89 = vmatpush.msra.mxu0 %v27
    %90 = vmatpush.msra.mxu0 %v25
    %91 = vmatpush.msra.mxu0 %v23
    %92 = vmatpush.msra.mxu0 %v21
    %93 = vmatpush.msra.mxu0 %v19
    %94 = vmatpush.msra.mxu0 %v17
    %95 = vmatmul.f32.gmra.mxu0 %v50
    %v96 = vpop.f32.mrf.mxu0
    %v97 = vadd.f32 %v45, %v96
    %98 = vdwg.mxu0
    %v99 = vmax.f32 %v77, 0.0
    %v100 = vmax.f32 %v97, 0.0
    %101 = vst [vmem:[#allocation2] sm:$0xff] %v99
    %vm102 = vcmask 588800
    %103 = vst.msk [vmem:[#allocation2 + $0x8] sm:$0xff] %vm102, %v100
    // Predicated region
    $region14: #{part1_forward_pallas.1} parent=1 // pred_check
      _
    $region15: #{part1_forward_pallas.1} parent=1 // pred_check_branch
      %105 = sbr.rel (0) target = $region17
    $region16: #{part1_forward_pallas.1} parent=1 // pred_region
      %107 = vsyncadd [#allocation3], 0
      %s109 = sshll.u32 [#allocation2], 4
      %s110 = int_to_ptr.vmem [resolvable:$true] %s109
      %s111 = sshll.u32 %s3, 4
      %s112 = int_to_ptr.hbm [resolvable:$true] %s111
      %114 = dma.vmem_to_hbm [thread:$0]  %s110, 256, %s112, [#allocation3]
    $region17: #{part1_forward_pallas.1} parent=1 // pred_fallthru
      _
    // Predicated region
    $region18: #{part1_forward_pallas.1} parent=1 // pred_check
      _
    $region19: #{part1_forward_pallas.1} parent=1 // pred_check_branch
      %116 = sbr.rel (0) target = $region21
    $region20: #{part1_forward_pallas.1} parent=1 // pred_region
      %118 = dma.done [#allocation3], 256
    $region21: #{part1_forward_pallas.1} parent=1 // pred_fallthru
      _
    %119 = vsyncpa [#allocation3], 1

</llo_original>
